<compile_context>
chip_gen: v7x
topology: tpu7x:2x2x1
jax: 0.10.0
libtpu: 0.0.40
codegen_flags: <defaults>
</compile_context>

<pallas_src>
import functools
import math

import jax
import jax.numpy as jnp
from jax.experimental import pallas as pl
from jax.experimental.pallas import tpu as pltpu

_EPS = 1e-5


# ---------------------------------------------------------------------------
# Kernels
# ---------------------------------------------------------------------------
def _ln_rows_kernel(x_ref, w_ref, b_ref, o_ref):
    """One normalized group per row.  x_ref: (tm, C); w_ref/b_ref: (1, C)."""
    x = x_ref[...].astype(jnp.float32)
    mu = jnp.mean(x, axis=-1, keepdims=True)
    d = x - mu
    var = jnp.mean(d * d, axis=-1, keepdims=True)          # unbiased=False
    inv = jax.lax.rsqrt(var + _EPS)
    w = w_ref[...].astype(jnp.float32)
    b = b_ref[...].astype(jnp.float32)
    o_ref[...] = (d * inv * w + b).astype(o_ref.dtype)


def _group_selectors(c, g):
    """Block-diagonal 0/1 selectors built in-kernel (no extra inputs / DMAs).

    m : (L, g)  with m[i, j] = (i // c == j)   -- per-group reduce
    mt: (g, L)  its transpose                  -- per-group stat replicate
    """
    L = c * g
    lane_grp = jax.lax.broadcasted_iota(jnp.int32, (L, g), 0) // c
    col = jax.lax.broadcasted_iota(jnp.int32, (L, g), 1)
    m = (lane_grp == col).astype(jnp.float32)
    lane_grp_t = jax.lax.broadcasted_iota(jnp.int32, (g, L), 1) // c
    row = jax.lax.broadcasted_iota(jnp.int32, (g, L), 0)
    mt = (lane_grp_t == row).astype(jnp.float32)
    return m, mt


def _ln_packed_twopass_kernel(x_ref, w_ref, b_ref, o_ref, *, c, g):
    """g groups of C channels packed per 128-lane row; stable (x - mu) form."""
    x = x_ref[...].astype(jnp.float32)
    m, mt = _group_selectors(c, g)
    hp = jax.lax.Precision.HIGHEST
    inv_c = 1.0 / c
    mu_g = jnp.dot(x, m, preferred_element_type=jnp.float32, precision=hp) * inv_c
    mu = jnp.dot(mu_g, mt, preferred_element_type=jnp.float32, precision=hp)
    d = x - mu
    var_g = jnp.dot(d * d, m, preferred_element_type=jnp.float32, precision=hp) * inv_c
    inv_g = jax.lax.rsqrt(var_g + _EPS)
    inv = jnp.dot(inv_g, mt, preferred_element_type=jnp.float32, precision=hp)
    w = w_ref[...].astype(jnp.float32)
    b = b_ref[...].astype(jnp.float32)
    o_ref[...] = (d * inv * w + b).astype(o_ref.dtype)


def _ln_packed_fused_kernel(x_ref, w_ref, b_ref, o_ref, *, c, g):
    """Packed layout, E[x^2]-mu^2 form: fewer serialized full-tile passes.

    Gated by the numerical probe (_packed_mode); two-pass kernel is the fallback.
    """
    x = x_ref[...].astype(jnp.float32)
    m, mt = _group_selectors(c, g)
    hp = jax.lax.Precision.HIGHEST
    inv_c = 1.0 / c
    # Two independent reduce-matmuls (no dot->sub->dot dependency chain).
    s_g = jnp.dot(x, m, preferred_element_type=jnp.float32, precision=hp) * inv_c       # E[x]
    q_g = jnp.dot(x * x, m, preferred_element_type=jnp.float32, precision=hp) * inv_c   # E[x^2]
    var_g = q_g - s_g * s_g
    alpha_g = jax.lax.rsqrt(var_g + _EPS)
    beta_g = -s_g * alpha_g
    # Two independent replicate-matmuls.
    alpha = jnp.dot(alpha_g, mt, preferred_element_type=jnp.float32, precision=hp)
    beta = jnp.dot(beta_g, mt, preferred_element_type=jnp.float32, precision=hp)
    w = w_ref[...].astype(jnp.float32)
    b = b_ref[...].astype(jnp.float32)
    o_ref[...] = ((alpha * x + beta) * w + b).astype(o_ref.dtype)


# ---------------------------------------------------------------------------
# Wrapper helpers
# ---------------------------------------------------------------------------
def _cparams(vmem_limit_bytes):
    return pltpu.CompilerParams(
        dimension_semantics=("parallel",),
        vmem_limit_bytes=int(vmem_limit_bytes),
    )


def _pick_group(c, rows):
    """Rows folded per lane-row so the kernel's lane dim is a multiple of 128."""
    if c % 128 == 0:
        return 1
    g = 128 // math.gcd(c, 128)
    if g > 64 or rows < g:
        return 1
    return g


def _choose_tile_rows(rows, width, io_itemsize, target_tile_bytes, max_f32_tile_bytes):
    """Rows per grid step for a (rows, width) array (width = lane dim in the kernel).

    Sized by HBM bytes per step (I/O dtype), capped by f32 temporaries per tile,
    with an even (prefer >= 8) number of grid steps for v7x's two TensorCores.
    """
    align = 8 if io_itemsize >= 4 else (16 if io_itemsize == 2 else 32)
    if rows <= 2 * align:
        return rows                              # single block == full array extent

    def rup(v):
        return ((v + align - 1) // align) * align

    row_io_bytes = width * io_itemsize           # HBM bytes per row per direction
    row_f32_bytes = width * 4                    # in-kernel f32 temporaries per row
    tm = min(target_tile_bytes // row_io_bytes, max_f32_tile_bytes // row_f32_bytes)
    tm = max(align, (tm // align) * align)

    # Prefer >= 8 grid steps (pipelining + megacore) unless tiles would drop below
    # ~512 KiB of HBM traffic each.
    min_tm = max(align, ((512 * 1024) // row_io_bytes) // align * align)
    tm8 = rup(pl.cdiv(rows, 8))
    if tm8 >= min_tm:
        tm = min(tm, tm8)

    if tm >= rows:
        # Not enough rows for the target tile: still use >= 2 steps so v7x's two
        # TensorCores can split the "parallel" grid axis.
        tm = rup(pl.cdiv(rows, 2))
        if tm >= rows:
            return rows

    # Make the step count even (odd counts leave one v7x core with an extra step).
    nsteps = pl.cdiv(rows, tm)
    if nsteps > 1 and nsteps % 2 == 1:
        tm = max(align, rup(pl.cdiv(rows, nsteps + 1)))   # best effort
    return tm


def _vmem_limit(tm, width, io_itemsize, extra_f32_elems=0):
    """Explicit scoped-VMEM budget: double-buffered in/out blocks + f32 temporaries.

    Clamped to 48 MiB so the same config is safe on v7x (64 MiB physical VMEM) while
    never being silently capped by the 16/32 MiB scoped defaults on v5e/v6e.
    """
    io_tile = tm * width * io_itemsize
    f32_tile = tm * width * 4
    need = 2 * 2 * io_tile            # double-buffered input + output blocks
    need += 6 * f32_tile              # f32 temporaries inside the kernel body
    need += 4 * extra_f32_elems       # selectors / params
    need += 2 << 20                   # slack
    return int(min(max(need, 16 << 20), 48 << 20))


def _pallas_ln_rows(x2, w2, b2, tm, vmem_limit_bytes):
    rows, c = x2.shape
    return pl.pallas_call(
        _ln_rows_kernel,
        out_shape=jax.ShapeDtypeStruct((rows, c), x2.dtype),
        grid_spec=pltpu.PrefetchScalarGridSpec(
            num_scalar_prefetch=0,
            grid=(pl.cdiv(rows, tm),),
            in_specs=[
                pl.BlockSpec((tm, c), lambda i: (i, 0)),
                pl.BlockSpec((1, c), lambda i: (0, 0)),
                pl.BlockSpec((1, c), lambda i: (0, 0)),
            ],
            out_specs=pl.BlockSpec((tm, c), lambda i: (i, 0)),
        ),
        compiler_params=_cparams(vmem_limit_bytes),
    )(x2, w2, b2)


def _pallas_ln_packed(xp, w_l, b_l, c, g, mode, tm, vmem_limit_bytes):
    rows_p, L = xp.shape
    body = _ln_packed_fused_kernel if mode == "fused" else _ln_packed_twopass_kernel
    kernel = functools.partial(body, c=c, g=g)
    return pl.pallas_call(
        kernel,
        out_shape=jax.ShapeDtypeStruct((rows_p, L), xp.dtype),
        grid_spec=pltpu.PrefetchScalarGridSpec(
            num_scalar_prefetch=0,
            grid=(pl.cdiv(rows_p, tm),),
            in_specs=[
                pl.BlockSpec((tm, L), lambda i: (i, 0)),
                pl.BlockSpec((1, L), lambda i: (0, 0)),
                pl.BlockSpec((1, L), lambda i: (0, 0)),
            ],
            out_specs=pl.BlockSpec((tm, L), lambda i: (i, 0)),
        ),
        compiler_params=_cparams(vmem_limit_bytes),
    )(xp, w_l, b_l)


def _layernorm_2d(x2, weight, bias, g, mode, target_tile_bytes, max_f32_tile_bytes,
                  vmem_limit_bytes):
    rows, c = x2.shape
    itemsize = x2.dtype.itemsize
    if g > 1 and mode in ("fused", "twopass"):
        L = g * c
        rows_pad = pl.cdiv(rows, g) * g
        if rows_pad != rows:
            # <= g-1 extra rows; the tiny pad/slice copies are far cheaper than the
            # lane-sparse masked-store fallback for the whole tensor.
            x2p = jnp.pad(x2, ((0, rows_pad - rows), (0, 0)))
        else:
            x2p = x2
        xp = x2p.reshape(rows_pad // g, L)            # free: row-major contiguous
        w_l = jnp.tile(weight.reshape(1, c), (1, g))
        b_l = jnp.tile(bias.reshape(1, c), (1, g))
        tm = _choose_tile_rows(rows_pad // g, L, itemsize,
                               target_tile_bytes, max_f32_tile_bytes)
        vmem = vmem_limit_bytes if vmem_limit_bytes is not None else \
            _vmem_limit(tm, L, itemsize, extra_f32_elems=2 * L * g + 2 * L)
        yp = _pallas_ln_packed(xp, w_l, b_l, c, g, mode, tm, vmem)
        y2 = yp.reshape(rows_pad, c)
        if rows_pad != rows:
            y2 = y2[:rows]
        return y2
    else:
        w2 = weight.reshape(1, c)
        b2 = bias.reshape(1, c)
        tm = _choose_tile_rows(rows, c, itemsize, target_tile_bytes, max_f32_tile_bytes)
        vmem = vmem_limit_bytes if vmem_limit_bytes is not None else \
            _vmem_limit(tm, c, itemsize, extra_f32_elems=2 * c)
        return _pallas_ln_rows(x2, w2, b2, tm, vmem)


@functools.lru_cache(maxsize=None)
def _packed_mode(c, g):
    """One-time probe per (C, g): each packed variant must lower AND match a pure-JAX
    f32 reference.  Returns 'fused', 'twopass', or 'rows' (fallback order)."""
    try:
        rows = 64 * g + 3                    # also exercises the row-padding path
        kx, kw, kb = jax.random.split(jax.random.PRNGKey(1234), 3)
        x = jax.random.normal(kx, (rows, c), jnp.float32) * 2.0 + 3.0
        w = jax.random.normal(kw, (c,), jnp.float32)
        b = jax.random.normal(kb, (c,), jnp.float32)
        mu = jnp.mean(x, axis=-1, keepdims=True)
        var = jnp.mean((x - mu) ** 2, axis=-1, keepdims=True)
        ref = (x - mu) * jax.lax.rsqrt(var + _EPS) * w + b
    except Exception:
        return "rows"
    for mode in ("fused", "twopass"):
        try:
            y = _layernorm_2d(x, w, b, g, mode, 1 << 20, 4 << 20, None)
            if bool(jnp.allclose(y, ref, atol=3e-5, rtol=1e-5)):
                return mode
        except Exception:
            pass
    return "rows"


def with_bias_layernorm(x, weight, bias, *, target_tile_bytes=2 << 20,
                        max_f32_tile_bytes=4 << 20, vmem_limit_bytes=None):
    """LayerNorm over the last axis. x: (..., C); weight, bias: (C,). Returns x.shape."""
    c = x.shape[-1]
    rows = int(math.prod(x.shape[:-1])) if x.ndim > 1 else 1
    x2 = x.reshape(rows, c)
    g = _pick_group(c, rows)
    mode = "rows"
    if g > 1:
        mode = _packed_mode(c, g)
        if mode == "rows":
            g = 1
    y2 = _layernorm_2d(x2, weight, bias, g, mode,
                       target_tile_bytes, max_f32_tile_bytes, vmem_limit_bytes)
    return y2.reshape(x.shape)


# ---------------------------------------------------------------------------
# Demo / self-check
# ---------------------------------------------------------------------------
def _reference(x, weight, bias):
    xf = x.astype(jnp.float32)
    mu = jnp.mean(xf, axis=-1, keepdims=True)
    var = jnp.mean((xf - mu) ** 2, axis=-1, keepdims=True)
    return (xf - mu) / jnp.sqrt(var + _EPS) * weight + bias


if __name__ == "__main__":
    key = jax.random.PRNGKey(0)
    k1, k2, k3, k4, k5, k6 = jax.random.split(key, 6)

    # 1) Module-consistent shapes: B=2, H=W=8 -> tokens T=64, normalized_shape C=32.
    #    Parameters initialized exactly like the module (ones / zeros).
    B, H, W, C = 2, 8, 8, 32
    T = H * W
    x = jax.random.normal(k1, (B, T, C), dtype=jnp.float32)
    weight = jnp.ones((C,), dtype=jnp.float32)
    bias = jnp.zeros((C,), dtype=jnp.float32)
    y = jax.block_until_ready(with_bias_layernorm(x, weight, bias))
    ref = _reference(x, weight, bias)
    assert jnp.allclose(y, ref, atol=1e-5, rtol=1e-5), float(jnp.max(jnp.abs(y - ref)))

    # 2) Ragged row count + C=48: now stays on the lane-dense packed path via row padding
    #    (rows=74, g=8 -> padded to 80, sliced back).
    C2 = 48
    x2 = jax.random.normal(k2, (2, 37, C2), dtype=jnp.float32)
    w2 = jax.random.normal(k3, (C2,), dtype=jnp.float32)
    b2 = jax.random.normal(k4, (C2,), dtype=jnp.float32)
    y2 = jax.block_until_ready(with_bias_layernorm(x2, w2, b2))
    ref2 = _reference(x2, w2, b2)
    assert jnp.allclose(y2, ref2, atol=1e-5, rtol=1e-5), float(jnp.max(jnp.abs(y2 - ref2)))

    # 3) bf16 activations pass straight through (halves HBM traffic; tm doubles); f32 stats.
    C3 = 96
    x3 = jax.random.normal(k5, (2, 64, C3), dtype=jnp.float32).astype(jnp.bfloat16)
    w3 = jnp.ones((C3,), dtype=jnp.float32)
    b3 = jnp.zeros((C3,), dtype=jnp.float32)
    y3 = jax.block_until_ready(with_bias_layernorm(x3, w3, b3))
    assert y3.dtype == jnp.bfloat16
    ref3 = _reference(x3, w3, b3)
    err3 = jnp.max(jnp.abs(y3.astype(jnp.float32) - ref3))
    assert float(err3) < 2e-2, float(err3)

    # 4) Ragged last grid block on-device (rows % tm != 0) with a lane-dense C=128 layout;
    #    small target tile forces a multi-step (even) grid.
    C4 = 128
    x4 = jax.random.normal(k6, (600, C4), dtype=jnp.float32)
    w4 = jax.random.normal(k3, (C4,), dtype=jnp.float32)
    b4 = jax.random.normal(k4, (C4,), dtype=jnp.float32)
    y4 = jax.block_until_ready(with_bias_layernorm(x4, w4, b4, target_tile_bytes=1 << 16))
    ref4 = _reference(x4, w4, b4)
    assert jnp.allclose(y4, ref4, atol=1e-5, rtol=1e-5), float(jnp.max(jnp.abs(y4 - ref4)))

    # 5) Odd C (g would be 128) -> robust per-row fallback path.
    C5 = 33
    x5 = jax.random.normal(k1, (2, 20, C5), dtype=jnp.float32)
    w5 = jax.random.normal(k2, (C5,), dtype=jnp.float32)
    b5 = jax.random.normal(k5, (C5,), dtype=jnp.float32)
    y5 = jax.block_until_ready(with_bias_layernorm(x5, w5, b5))
    ref5 = _reference(x5, w5, b5)
    assert jnp.allclose(y5, ref5, atol=1e-5, rtol=1e-5), float(jnp.max(jnp.abs(y5 - ref5)))

    print("KERNEL_OK")
</pallas_src>

<mosaic_0001>
module attributes {stable_mosaic.version = 11 : i64} {
  func.func @_ln_rows_kernel(%arg0: i32, %arg1: memref<64x32xf32, #tpu.memory_space<vmem>>, %arg2: memref<1x32xf32, #tpu.memory_space<vmem>>, %arg3: memref<1x32xf32, #tpu.memory_space<vmem>>, %arg4: memref<64x32xf32, #tpu.memory_space<vmem>>) attributes {dimension_semantics = [#tpu.dimension_semantics<parallel>], iteration_bounds = array<i64: 2>, scalar_prefetch = 0 : i64, scratch_operands = 0 : i64, tpu.core_type = #tpu.core_type<tc>, window_params = [{transform_indices = @transform_0, window_bounds = array<i64: 64, 32>}, {pipeline_mode = #tpu.pipeline_mode<synchronous>, transform_indices = @transform_1, window_bounds = array<i64: 1, 32>}, {pipeline_mode = #tpu.pipeline_mode<synchronous>, transform_indices = @transform_2, window_bounds = array<i64: 1, 32>}, {transform_indices = @transform_3, window_bounds = array<i64: 64, 32>}]} {
    %c0 = arith.constant 0 : index
    %c0_0 = arith.constant 0 : index
    %0 = vector.load %arg1[%c0, %c0_0] : memref<64x32xf32, #tpu.memory_space<vmem>>, vector<64x32xf32>
    %cst = arith.constant dense<0.000000e+00> : vector<64xf32>
    %1 = vector.multi_reduction <add>, %0, %cst [1] : vector<64x32xf32> to vector<64xf32>
    %2 = vector.shape_cast %1 : vector<64xf32> to vector<64x1xf32>
    %cst_1 = arith.constant 3.200000e+01 : f32
    %3 = vector.broadcast %cst_1 : f32 to vector<64x1xf32>
    %4 = arith.divf %2, %3 : vector<64x1xf32>
    %5 = vector.broadcast %4 : vector<64x1xf32> to vector<64x32xf32>
    %6 = arith.subf %0, %5 : vector<64x32xf32>
    %7 = arith.mulf %6, %6 : vector<64x32xf32>
    %cst_2 = arith.constant dense<0.000000e+00> : vector<64xf32>
    %8 = vector.multi_reduction <add>, %7, %cst_2 [1] : vector<64x32xf32> to vector<64xf32>
    %9 = vector.shape_cast %8 : vector<64xf32> to vector<64x1xf32>
    %cst_3 = arith.constant 3.200000e+01 : f32
    %10 = vector.broadcast %cst_3 : f32 to vector<64x1xf32>
    %11 = arith.divf %9, %10 : vector<64x1xf32>
    %cst_4 = arith.constant 9.99999974E-6 : f32
    %12 = vector.broadcast %cst_4 : f32 to vector<64x1xf32>
    %13 = arith.addf %11, %12 : vector<64x1xf32>
    %14 = math.rsqrt %13 : vector<64x1xf32>
    %c0_5 = arith.constant 0 : index
    %c0_6 = arith.constant 0 : index
    %15 = vector.load %arg2[%c0_5, %c0_6] : memref<1x32xf32, #tpu.memory_space<vmem>>, vector<1x32xf32>
    %c0_7 = arith.constant 0 : index
    %c0_8 = arith.constant 0 : index
    %16 = vector.load %arg3[%c0_7, %c0_8] : memref<1x32xf32, #tpu.memory_space<vmem>>, vector<1x32xf32>
    %17 = vector.broadcast %14 : vector<64x1xf32> to vector<64x32xf32>
    %18 = arith.mulf %6, %17 : vector<64x32xf32>
    %19 = vector.broadcast %15 : vector<1x32xf32> to vector<64x32xf32>
    %20 = arith.mulf %18, %19 : vector<64x32xf32>
    %21 = vector.broadcast %16 : vector<1x32xf32> to vector<64x32xf32>
    %22 = arith.addf %20, %21 : vector<64x32xf32>
    %c0_9 = arith.constant 0 : index
    %c0_10 = arith.constant 0 : index
    %23 = vector.load %arg4[%c0_9, %c0_10] : memref<64x32xf32, #tpu.memory_space<vmem>>, vector<64x32xf32>
    tpu.vector_store %arg4[%c0_9, %c0_10], %22 {strides = array<i32>} : memref<64x32xf32, #tpu.memory_space<vmem>>, vector<64x32xf32>,
    return
  }
  func.func @transform_0(%arg0: i32) -> (i32, i32) {
    %c0_i32 = arith.constant 0 : i32
    %c0_i32_0 = arith.constant 0 : i32
    return %arg0, %c0_i32 : i32, i32
  }
  func.func @transform_1(%arg0: i32) -> (i32, i32) {
    %c0_i32 = arith.constant 0 : i32
    %c0_i32_0 = arith.constant 0 : i32
    %c0_i32_1 = arith.constant 0 : i32
    return %c0_i32, %c0_i32_0 : i32, i32
  }
  func.func @transform_2(%arg0: i32) -> (i32, i32) {
    %c0_i32 = arith.constant 0 : i32
    %c0_i32_0 = arith.constant 0 : i32
    %c0_i32_1 = arith.constant 0 : i32
    return %c0_i32, %c0_i32_0 : i32, i32
  }
  func.func @transform_3(%arg0: i32) -> (i32, i32) {
    %c0_i32 = arith.constant 0 : i32
    %c0_i32_0 = arith.constant 0 : i32
    return %arg0, %c0_i32 : i32, i32
  }
}

</mosaic_0001>

<llo_original>
// kernel: tpu_custom_call.1
$region0: #{tpu_custom_call.1}
  #allocation0 [shape = 'u32[]', space=smem, size = 0x4, offset = 0x4, fixed_abs, tag = 'smem constant byte address 0x4 - core index']
  #allocation1 [shape = 'u32[144,128]{1,0:T(1,128)}', space=vmem, size = 0x12000, scoped, tag = 'internal scratch']
  %s0 = inlined_call_operand.vmem [shape: f32[128,32], index: 0, kind: input, shape index: {}]
  %s1 = inlined_call_operand.vmem [shape: f32[1,32], index: 1, kind: input, shape index: {}]
  %s2 = inlined_call_operand.vmem [shape: f32[1,32], index: 2, kind: input, shape index: {}]
  %s3 = inlined_call_operand.vmem [shape: f32[128,32], index: 3, kind: output, shape index: {}]
  %s4 = sld [smem:[#allocation0]]
  $region45: #{tpu_custom_call.1} parent=0
    _
  %s6 = ssub.s32 1, %s4
  %s7 = scalar_select 0, %s6, %s4
  loop: start=0, step=1, limit=4
  $region2: #{tpu_custom_call.1} parent=0 // loop_pre_header
    _
  $region3: #{tpu_custom_call.1} parent=0 // loop_header
    %s9 = sphi 0, %s13
    %p10 = scmp.ge.s32.totalorder %s9, 4
    %s19 = sphi 0, %s21
    %s22 = sphi 0, %s19
    %s23 = sphi 0, %s22
    %s39 = sphi 0, %s23
    %s43 = sphi 0, %s43
    %s45 = sphi 0, %s43
    %s46 = sphi 0, %s45
    %s60 = sphi 0, %s46
    %s64 = sphi 0, %s64
    %s66 = sphi 0, %s64
    %s67 = sphi 0, %s66
    %s81 = sphi 0, %s67
    %s87 = sphi 0, %s89
    %s90 = sphi 0, %s87
    %s91 = sphi 0, %s90
    %s107 = sphi 0, %s91
  $region4: #{tpu_custom_call.1} parent=0 // loop_header_branch
    %12 = sbr.rel (%p10) target = $region8
  $region5: #{tpu_custom_call.1} parent=0 // loop_body
    %s14 = ssub.s32 %s9, 1
    %s15 = ssub.s32 %s9, 2
    %s16 = sadd.s32 %s9, 1
    %s17 = ssub.s32 %s9, %s16
    %p18 = scmp.eq.s32.totalorder %s17, 0
    %s20 = sadd.s32 %s19, 1
    %s21 = scalar_select %p18, %s19, %s20
    %p24 = pneg %p18
    %p25 = scmp.eq.s32.totalorder %s9, 1
    %p26 = por %p24, %p25
    %p27 = scmp.ne.s32.totalorder %s19, %s22
    %p28 = scmp.eq.s32.totalorder %s9, 0
    %p29 = por %p27, %p28
    %p30 = scmp.ne.s32.totalorder %s19, %s22
    %p31 = scmp.eq.s32.totalorder %s14, 1
    %p32 = por %p30, %p31
    %p33 = scmp.ne.s32.totalorder %s22, %s23
    %p34 = scmp.eq.s32.totalorder %s14, 0
    %p35 = por %p33, %p34
    %p36 = scmp.ne.s32.totalorder %s22, %s23
    %p37 = scmp.eq.s32.totalorder %s15, 1
    %p38 = por %p36, %p37
    %p40 = scmp.ne.s32.totalorder %s23, %s39
    %p41 = scmp.eq.s32.totalorder %s15, 0
    %p42 = por %p40, %p41
    %s44 = sadd.s32 %s43, 1
    %p47 = scmp.eq.s32.totalorder %s9, 1
    %p48 = scmp.ne.s32.totalorder %s43, %s45
    %p49 = scmp.eq.s32.totalorder %s9, 0
    %p50 = por %p48, %p49
    %p51 = scmp.ne.s32.totalorder %s43, %s45
    %p52 = scmp.eq.s32.totalorder %s14, 1
    %p53 = por %p51, %p52
    %p54 = scmp.ne.s32.totalorder %s45, %s46
    %p55 = scmp.eq.s32.totalorder %s14, 0
    %p56 = por %p54, %p55
    %p57 = scmp.ne.s32.totalorder %s45, %s46
    %p58 = scmp.eq.s32.totalorder %s15, 1
    %p59 = por %p57, %p58
    %p61 = scmp.ne.s32.totalorder %s46, %s60
    %p62 = scmp.eq.s32.totalorder %s15, 0
    %p63 = por %p61, %p62
    %s65 = sadd.s32 %s64, 1
    %p68 = scmp.eq.s32.totalorder %s9, 1
    %p69 = scmp.ne.s32.totalorder %s64, %s66
    %p70 = scmp.eq.s32.totalorder %s9, 0
    %p71 = por %p69, %p70
    %p72 = scmp.ne.s32.totalorder %s64, %s66
    %p73 = scmp.eq.s32.totalorder %s14, 1
    %p74 = por %p72, %p73
    %p75 = scmp.ne.s32.totalorder %s66, %s67
    %p76 = scmp.eq.s32.totalorder %s14, 0
    %p77 = por %p75, %p76
    %p78 = scmp.ne.s32.totalorder %s66, %s67
    %p79 = scmp.eq.s32.totalorder %s15, 1
    %p80 = por %p78, %p79
    %p82 = scmp.ne.s32.totalorder %s67, %s81
    %p83 = scmp.eq.s32.totalorder %s15, 0
    %p84 = por %p82, %p83
    %s85 = ssub.s32 %s9, %s16
    %p86 = scmp.eq.s32.totalorder %s85, 0
    %s88 = sadd.s32 %s87, 1
    %s89 = scalar_select %p86, %s87, %s88
    %p92 = pneg %p86
    %p93 = scmp.eq.s32.totalorder %s9, 1
    %p94 = por %p92, %p93
    %p95 = scmp.ne.s32.totalorder %s87, %s90
    %p96 = scmp.eq.s32.totalorder %s9, 0
    %p97 = por %p95, %p96
    %p98 = scmp.ne.s32.totalorder %s87, %s90
    %p99 = scmp.eq.s32.totalorder %s14, 1
    %p100 = por %p98, %p99
    %p101 = scmp.ne.s32.totalorder %s90, %s91
    %p102 = scmp.eq.s32.totalorder %s14, 0
    %p103 = por %p101, %p102
    %p104 = scmp.ne.s32.totalorder %s90, %s91
    %p105 = scmp.eq.s32.totalorder %s15, 1
    %p106 = por %p104, %p105
    %p108 = scmp.ne.s32.totalorder %s91, %s107
    %p109 = scmp.eq.s32.totalorder %s15, 0
    %p110 = por %p108, %p109
    %p111 = scmp.le.s32.totalorder 1, %s9
    %p112 = scmp.lt.s32.totalorder %s9, 3
    %p113 = pnand %p111, %p112
    %p114 = pneg %p113
    // Predicated region
    $region9: #{tpu_custom_call.1} parent=5 // pred_check
      _
    $region10: #{tpu_custom_call.1} parent=5 // pred_check_branch
      %116 = sbr.rel (%p113) target = $region12
    $region11: #{tpu_custom_call.1} parent=5 // pred_region
      %s117 = ssub.s32 %s9, 1
      // Predicated region
      $region13: #{tpu_custom_call.1} parent=11 // pred_check
        %p118 = pneg %p56
      $region14: #{tpu_custom_call.1} parent=11 // pred_check_branch
        %120 = sbr.rel (%p118) target = $region16
      $region15: #{tpu_custom_call.1} parent=11 // pred_region
        _
      $region16: #{tpu_custom_call.1} parent=11 // pred_fallthru
        _
      // Predicated region
      $region17: #{tpu_custom_call.1} parent=11 // pred_check
        %p121 = pneg %p77
      $region18: #{tpu_custom_call.1} parent=11 // pred_check_branch
        %123 = sbr.rel (%p121) target = $region20
      $region19: #{tpu_custom_call.1} parent=11 // pred_region
        _
      $region20: #{tpu_custom_call.1} parent=11 // pred_fallthru
        _
    $region12: #{tpu_custom_call.1} parent=5 // pred_fallthru
      _
    %p124 = scmp.lt.s32.totalorder %s9, 2
    // Predicated region
    $region21: #{tpu_custom_call.1} parent=5 // pred_check
      %p125 = pneg %p124
    $region22: #{tpu_custom_call.1} parent=5 // pred_check_branch
      %127 = sbr.rel (%p125) target = $region24
    $region23: #{tpu_custom_call.1} parent=5 // pred_region
      // Predicated region
      $region25: #{tpu_custom_call.1} parent=23 // pred_check
        %p128 = pneg %p29
      $region26: #{tpu_custom_call.1} parent=23 // pred_check_branch
        %130 = sbr.rel (%p128) target = $region28
      $region27: #{tpu_custom_call.1} parent=23 // pred_region
        %s131 = smul.u32 8, %s9
        %p132 = scmp.lt.s32.totalorder %s131, 15
        %s133 = scalar_select %p132, %s131, 15
        %s134 = smul.addr %s133, 8
        %s135 = scalar_lea.vmem %s0, %s134
        %s136 = smul.u32 8, %s9
      $region28: #{tpu_custom_call.1} parent=23 // pred_fallthru
        _
    $region24: #{tpu_custom_call.1} parent=5 // pred_fallthru
      _
    %p137 = scmp.le.s32.totalorder 1, %s9
    %p138 = scmp.lt.s32.totalorder %s9, 3
    %p139 = pnand %p137, %p138
    %p140 = pneg %p139
    // Predicated region
    $region29: #{tpu_custom_call.1} parent=5 // pred_check
      _
    $region30: #{tpu_custom_call.1} parent=5 // pred_check_branch
      %142 = sbr.rel (%p139) target = $region32
    $region31: #{tpu_custom_call.1} parent=5 // pred_region
      %s143 = ssub.s32 %s9, 1
      %s144 = smul.u32 8, %s14
      %p145 = scmp.lt.s32.totalorder %s144, 15
      %s146 = scalar_select %p145, %s144, 15
      %s147 = smul.addr %s146, 8
      %s148 = scalar_lea.vmem %s0, %s147
      %p149 = pneg %p35
      %p150 = pneg %p32
      %p151 = pneg %p56
      %p152 = pneg %p53
      %p153 = pneg %p77
      %p154 = pneg %p74
      %p155 = pneg %p103
      %p156 = pneg %p100
      %s157 = smul.u32 8, %s14
      %p158 = scmp.lt.s32.totalorder %s157, 15
      %s159 = scalar_select %p158, %s157, 15
      %s160 = smul.addr %s159, 8
      %s161 = scalar_lea.vmem %s3, %s160
      %s162 = smul.u32 8, %s14
      %p163 = scmp.lt.s32.totalorder %s162, 15
      %s164 = scalar_select %p163, %s162, 15
      %s165 = smul.addr %s164, 8
      %s166 = scalar_lea.vmem %s0, %s165
      %s167 = smul.u32 8, %s14
      %s168 = smul.u32 8, %s14
      %p169 = scmp.lt.s32.totalorder %s168, 15
      %s170 = scalar_select %p169, %s168, 15
      %s171 = smul.addr %s170, 8
      %s172 = scalar_lea.vmem %s3, %s171
      %s173 = smul.u32 8, %s14
      %v174 = vld [vmem:[%s166] sm:$0xff]
      %v175 = vld [vmem:[%s166 + $0x8] sm:$0xff]
      %v176 = vld [vmem:[%s166 + $0x10] sm:$0xff]
      %v177 = vld [vmem:[%s166 + $0x18] sm:$0xff]
      %v178 = vld [vmem:[%s166 + $0x20] sm:$0xff]
      %v179 = vld [vmem:[%s166 + $0x28] sm:$0xff]
      %v180 = vld [vmem:[%s166 + $0x30] sm:$0xff]
      %v181 = vld [vmem:[%s166 + $0x38] sm:$0xff]
      %vm182 = vcmask 261120
      %v183 = vsel %vm182, %v174, 0.0
      %184 = vadd.xlane.f32.xlu0 %v183
      %v185 = vpop.xlane.xlu0 %184
      %v186 = vsel %vm182, %v175, 0.0
      %187 = vadd.xlane.f32.xlu0 %v186
      %v188 = vpop.xlane.xlu0 %187
      %v189 = vsel %vm182, %v176, 0.0
      %190 = vadd.xlane.f32.xlu0 %v189
      %v191 = vpop.xlane.xlu0 %190
      %v192 = vsel %vm182, %v177, 0.0
      %193 = vadd.xlane.f32.xlu0 %v192
      %v194 = vpop.xlane.xlu0 %193
      %v195 = vsel %vm182, %v178, 0.0
      %196 = vadd.xlane.f32.xlu0 %v195
      %v197 = vpop.xlane.xlu0 %196
      %v198 = vsel %vm182, %v179, 0.0
      %199 = vadd.xlane.f32.xlu0 %v198
      %v200 = vpop.xlane.xlu0 %199
      %v201 = vsel %vm182, %v180, 0.0
      %202 = vadd.xlane.f32.xlu0 %v201
      %v203 = vpop.xlane.xlu0 %202
      %v204 = vsel %vm182, %v181, 0.0
      %205 = vadd.xlane.f32.xlu0 %v204
      %v206 = vpop.xlane.xlu0 %205
      %v207 = vrcp.pop 32.0
      %v208 = vmul.f32 %v185, %v207
      %v209 = vmul.f32 %v188, %v207
      %v210 = vmul.f32 %v191, %v207
      %v211 = vmul.f32 %v194, %v207
      %v212 = vmul.f32 %v197, %v207
      %v213 = vmul.f32 %v200, %v207
      %v214 = vmul.f32 %v203, %v207
      %v215 = vmul.f32 %v206, %v207
      %v216 = vsub.f32 %v174, %v208
      %v217 = vsub.f32 %v175, %v209
      %v218 = vsub.f32 %v176, %v210
      %v219 = vsub.f32 %v177, %v211
      %v220 = vsub.f32 %v178, %v212
      %v221 = vsub.f32 %v179, %v213
      %v222 = vsub.f32 %v180, %v214
      %v223 = vsub.f32 %v181, %v215
      %v224 = vmul.f32 %v216, %v216
      %v225 = vmul.f32 %v217, %v217
      %v226 = vmul.f32 %v218, %v218
      %v227 = vmul.f32 %v219, %v219
      %v228 = vmul.f32 %v220, %v220
      %v229 = vmul.f32 %v221, %v221
      %v230 = vmul.f32 %v222, %v222
      %v231 = vmul.f32 %v223, %v223
      %v232 = vsel %vm182, %v224, 0.0
      %233 = vadd.xlane.f32.xlu0 %v232
      %v234 = vpop.xlane.xlu0 %233
      %v235 = vsel %vm182, %v225, 0.0
      %236 = vadd.xlane.f32.xlu0 %v235
      %v237 = vpop.xlane.xlu0 %236
      %v238 = vsel %vm182, %v226, 0.0
      %239 = vadd.xlane.f32.xlu0 %v238
      %v240 = vpop.xlane.xlu0 %239
      %v241 = vsel %vm182, %v227, 0.0
      %242 = vadd.xlane.f32.xlu0 %v241
      %v243 = vpop.xlane.xlu0 %242
      %v244 = vsel %vm182, %v228, 0.0
      %245 = vadd.xlane.f32.xlu0 %v244
      %v246 = vpop.xlane.xlu0 %245
      %v247 = vsel %vm182, %v229, 0.0
      %248 = vadd.xlane.f32.xlu0 %v247
      %v249 = vpop.xlane.xlu0 %248
      %v250 = vsel %vm182, %v230, 0.0
      %251 = vadd.xlane.f32.xlu0 %v250
      %v252 = vpop.xlane.xlu0 %251
      %v253 = vsel %vm182, %v231, 0.0
      %254 = vadd.xlane.f32.xlu0 %v253
      %v255 = vpop.xlane.xlu0 %254
      %v256 = vmul.f32 %v234, %v207
      %v257 = vmul.f32 %v237, %v207
      %v258 = vmul.f32 %v240, %v207
      %v259 = vmul.f32 %v243, %v207
      %v260 = vmul.f32 %v246, %v207
      %v261 = vmul.f32 %v249, %v207
      %v262 = vmul.f32 %v252, %v207
      %v263 = vmul.f32 %v255, %v207
      %v264 = vadd.f32 %v256, 1e-05
      %v265 = vadd.f32 %v257, 1e-05
      %v266 = vadd.f32 %v258, 1e-05
      %v267 = vadd.f32 %v259, 1e-05
      %v268 = vadd.f32 %v260, 1e-05
      %v269 = vadd.f32 %v261, 1e-05
      %v270 = vadd.f32 %v262, 1e-05
      %v271 = vadd.f32 %v263, 1e-05
      %v272 = vrsqrt.pop %v264
      %v273 = vrsqrt.pop %v265
      %v274 = vrsqrt.pop %v266
      %v275 = vrsqrt.pop %v267
      %v276 = vrsqrt.pop %v268
      %v277 = vrsqrt.pop %v269
      %v278 = vrsqrt.pop %v270
      %v279 = vrsqrt.pop %v271
      %v280 = vld [vmem:[%s1] sm:$0x1]
      %v281 = vld [vmem:[%s2] sm:$0x1]
      %v282 = vmul.f32 %v216, %v272
      %v283 = vmul.f32 %v217, %v273
      %v284 = vmul.f32 %v218, %v274
      %v285 = vmul.f32 %v219, %v275
      %v286 = vmul.f32 %v220, %v276
      %v287 = vmul.f32 %v221, %v277
      %v288 = vmul.f32 %v222, %v278
      %v289 = vmul.f32 %v223, %v279
      %v291 = vlaneseq
      %v292 = vshrl.u32 %v291, 7
      %v293 = vsub.s32 0, %v292
      %v294 = vrot.slane %v280, %v293
      %v296 = vmul.f32 %v282, %v294
      %v297 = vmul.f32 %v283, %v294
      %v298 = vmul.f32 %v284, %v294
      %v299 = vmul.f32 %v285, %v294
      %v300 = vmul.f32 %v286, %v294
      %v301 = vmul.f32 %v287, %v294
      %v302 = vmul.f32 %v288, %v294
      %v303 = vmul.f32 %v289, %v294
      %v305 = vlaneseq
      %v306 = vshrl.u32 %v305, 7
      %v307 = vsub.s32 0, %v306
      %v308 = vrot.slane %v281, %v307
      %v310 = vadd.f32 %v296, %v308
      %v311 = vadd.f32 %v297, %v308
      %v312 = vadd.f32 %v298, %v308
      %v313 = vadd.f32 %v299, %v308
      %v314 = vadd.f32 %v300, %v308
      %v315 = vadd.f32 %v301, %v308
      %v316 = vadd.f32 %v302, %v308
      %v317 = vadd.f32 %v303, %v308
      %318 = vst.msk [vmem:[%s172] sm:$0xff] %vm182, %v310
      %319 = vst.msk [vmem:[%s172 + $0x8] sm:$0xff] %vm182, %v311
      %320 = vst.msk [vmem:[%s172 + $0x10] sm:$0xff] %vm182, %v312
      %321 = vst.msk [vmem:[%s172 + $0x18] sm:$0xff] %vm182, %v313
      %322 = vst.msk [vmem:[%s172 + $0x20] sm:$0xff] %vm182, %v314
      %323 = vst.msk [vmem:[%s172 + $0x28] sm:$0xff] %vm182, %v315
      %324 = vst.msk [vmem:[%s172 + $0x30] sm:$0xff] %vm182, %v316
      %325 = vst.msk [vmem:[%s172 + $0x38] sm:$0xff] %vm182, %v317
      %s326 = smul.u32 8, %s14
      %p327 = scmp.lt.s32.totalorder %s326, 15
      %s328 = scalar_select %p327, %s326, 15
      %s329 = smul.addr %s328, 8
      %s330 = scalar_lea.vmem %s3, %s329
      // Predicated region
      $region33: #{tpu_custom_call.1} parent=31 // pred_check
        %p331 = pneg %p100
      $region34: #{tpu_custom_call.1} parent=31 // pred_check_branch
        %333 = sbr.rel (%p331) target = $region36
      $region35: #{tpu_custom_call.1} parent=31 // pred_region
        %s334 = smul.u32 8, %s14
      $region36: #{tpu_custom_call.1} parent=31 // pred_fallthru
        _
    $region32: #{tpu_custom_call.1} parent=5 // pred_fallthru
      _
    %p335 = scmp.le.s32.totalorder 2, %s9
    // Predicated region
    $region37: #{tpu_custom_call.1} parent=5 // pred_check
      %p336 = pneg %p335
    $region38: #{tpu_custom_call.1} parent=5 // pred_check_branch
      %338 = sbr.rel (%p336) target = $region40
    $region39: #{tpu_custom_call.1} parent=5 // pred_region
      %s339 = ssub.s32 %s9, 2
      // Predicated region
      $region41: #{tpu_custom_call.1} parent=39 // pred_check
        %p340 = pneg %p106
      $region42: #{tpu_custom_call.1} parent=39 // pred_check_branch
        %342 = sbr.rel (%p340) target = $region44
      $region43: #{tpu_custom_call.1} parent=39 // pred_region
        %s343 = smul.u32 8, %s15
        %p344 = scmp.lt.s32.totalorder %s343, 15
        %s345 = scalar_select %p344, %s343, 15
        %s346 = smul.addr %s345, 8
        %s347 = scalar_lea.vmem %s3, %s346
      $region44: #{tpu_custom_call.1} parent=39 // pred_fallthru
        _
    $region40: #{tpu_custom_call.1} parent=5 // pred_fallthru
      _
  $region6: #{tpu_custom_call.1} parent=0 // loop_footer
    %s13 = sadd.s32 1, %s9
  $region7: #{tpu_custom_call.1} parent=0 // loop_footer_branch
    %8 = sbr.rel target = $region3
  $region8: #{tpu_custom_call.1} parent=0 // loop_exit
    _

</llo_original>
